<compile_context>
chip_gen: v7x
topology: tpu7x:2x2x1
jax: 0.10.0
libtpu: 0.0.40
codegen_flags: <defaults>
</compile_context>

<pallas_src>
import jax
import jax.numpy as jnp
from jax.experimental import pallas as pl
from jax.experimental.pallas import tpu as pltpu


def patch_embed_kernel(p_ref, w_ref, add_ref, o_ref):
    # p_ref  : (TILE_M, F) bf16  flattened patch rows for this tile
    # w_ref  : (F, E)      bf16  linear weight (in, out), resident across grid
    # add_ref: (TILE_M, E) f32   precomputed (bias + pos_emb[1:]) per row
    # o_ref  : (TILE_M, E) f32   output rows
    y = jnp.dot(p_ref[...], w_ref[...],
                preferred_element_type=jnp.float32)      # MXU, f32 accumulate
    o_ref[...] = (y + add_ref[...]).astype(o_ref.dtype)  # single fused VPU add


def _round_up(a, m):
    return ((a + m - 1) // m) * m


def image_embedding(x, weight, bias, cls_token, pos_emb, patch_size, tile_m=256):
    """x: (B, C, W, H) float32, NCHW.  Returns (B, N+1, E) float32."""
    B, C, W, H = x.shape
    p = patch_size
    num_w, num_h = W // p, H // p
    N = num_w * num_h
    F = p * p * C
    E = weight.shape[0]  # nn.Linear weight is (out_features, in_features)

    # einops: 'b c (num_w p1) (num_h p2) -> b (num_w num_h) (p1 p2 c)'
    # TODO(synk): for large images, fuse this rearrange into the kernel via
    # memory_space=pl.ANY + strided DMA instead of a materialized transpose.
    patches = x.reshape(B, C, num_w, p, num_h, p)
    patches = jnp.transpose(patches, (0, 2, 4, 3, 5, 1)).reshape(B * N, F)

    M = B * N
    # Big tiles when there is enough work; otherwise one sublane-aligned tile
    # covering all rows.  tile_m is either 256 (multiple of 16) or == M_pad,
    # so block shapes always satisfy the (8,128) / full-dim rule.
    tile_m = min(tile_m, _round_up(M, 8))
    M_pad = _round_up(M, tile_m)

    # bf16 operands, f32 accumulation.
    patches = patches.astype(jnp.bfloat16)
    w_t = weight.T.astype(jnp.bfloat16)                     # (F, E)

    # Batch-invariant additive term for the patch rows, fused once here.
    addend = (bias.reshape(1, E) + pos_emb[1:, :]).astype(jnp.float32)  # (N, E)
    addend = jnp.tile(addend, (B, 1))                                   # (M, E)

    if M_pad != M:
        patches = jnp.pad(patches, ((0, M_pad - M), (0, 0)))
        addend = jnp.pad(addend, ((0, M_pad - M), (0, 0)))

    y = pl.pallas_call(
        patch_embed_kernel,
        out_shape=jax.ShapeDtypeStruct((M_pad, E), jnp.float32),
        grid_spec=pltpu.PrefetchScalarGridSpec(
            num_scalar_prefetch=0,
            grid=(M_pad // tile_m,),
            in_specs=[
                pl.BlockSpec((tile_m, F), lambda i: (i, 0)),
                pl.BlockSpec((F, E), lambda i: (0, 0)),        # weight resident
                pl.BlockSpec((tile_m, E), lambda i: (i, 0)),
            ],
            out_specs=pl.BlockSpec((tile_m, E), lambda i: (i, 0)),
        ),
        compiler_params=pltpu.CompilerParams(
            dimension_semantics=("parallel",),
            vmem_limit_bytes=64 * 1024 * 1024,
        ),
    )(patches, w_t, addend)

    y = y[:M].reshape(B, N, E)

    # cls row done once in the wrapper (batch-invariant), aligned concat.
    cls_row = (cls_token.reshape(1, 1, E) + pos_emb[0:1, :].reshape(1, 1, E))
    cls_rows = jnp.broadcast_to(cls_row, (B, 1, E)).astype(y.dtype)
    return jnp.concatenate([cls_rows, y], axis=1)


def image_embedding_reference(x, weight, bias, cls_token, pos_emb, patch_size):
    """Plain-JAX f32 reference mirroring the PyTorch forward."""
    B, C, W, H = x.shape
    p = patch_size
    num_w, num_h = W // p, H // p
    N = num_w * num_h
    F = p * p * C
    patches = x.reshape(B, C, num_w, p, num_h, p)
    patches = jnp.transpose(patches, (0, 2, 4, 3, 5, 1)).reshape(B, N, F)
    y = patches @ weight.T + bias                       # (B, N, E)
    c = jnp.broadcast_to(cls_token.reshape(1, 1, -1), (B, 1, weight.shape[0]))
    y = jnp.concatenate([c, y], axis=1)                 # (B, N+1, E)
    return y + pos_emb[None, :, :]


if __name__ == "__main__":
    # Small shapes consistent with the module:
    #   in_channels=4, img_size=16, patch_size=8 -> F = 4*8*8 = 256, n_patches = 4
    #   emb_dim = patch_size**2 * in_channels = 256 (mirrors the default formula)
    batch = 2
    in_channels = 4
    img_size = 16
    patch_size = 8
    emb_dim = patch_size * patch_size * in_channels         # 256
    n_patches = (img_size * img_size) // (patch_size ** 2)  # 4
    in_features = in_channels * patch_size * patch_size     # 256

    key = jax.random.PRNGKey(0)
    kx, kw, kb, kc, kp = jax.random.split(key, 5)

    x = jax.random.normal(kx, (batch, in_channels, img_size, img_size), jnp.float32)

    # Deterministic synthetic parameters (nn.Linear shapes: W (out,in), b (out,))
    weight = jax.random.normal(kw, (emb_dim, in_features), jnp.float32) * (1.0 / jnp.sqrt(in_features))
    bias = jax.random.normal(kb, (emb_dim,), jnp.float32) * 0.01
    cls_token = jax.random.normal(kc, (1, 1, emb_dim), jnp.float32)
    pos_emb = jax.random.normal(kp, (n_patches + 1, emb_dim), jnp.float32)

    out = image_embedding(x, weight, bias, cls_token, pos_emb, patch_size)
    out = jax.block_until_ready(out)

    ref = image_embedding_reference(x, weight, bias, cls_token, pos_emb, patch_size)
    assert out.shape == (batch, n_patches + 1, emb_dim), out.shape
    # Tolerance loosened for bf16 matmul operands (f32 accumulation).
    assert jnp.allclose(out, ref, atol=5e-2, rtol=5e-2), float(jnp.max(jnp.abs(out - ref)))

    print("KERNEL_OK")
</pallas_src>

<mosaic_0001>
module attributes {stable_mosaic.version = 11 : i64} {
  func.func @patch_embed_kernel(%arg0: i32, %arg1: memref<8x256xbf16, #tpu.memory_space<vmem>>, %arg2: memref<256x256xbf16, #tpu.memory_space<vmem>>, %arg3: memref<8x256xf32, #tpu.memory_space<vmem>>, %arg4: memref<8x256xf32, #tpu.memory_space<vmem>>) attributes {dimension_semantics = [#tpu.dimension_semantics<parallel>], iteration_bounds = array<i64: 1>, scalar_prefetch = 0 : i64, scratch_operands = 0 : i64, tpu.core_type = #tpu.core_type<tc>, window_params = [{transform_indices = @transform_0, window_bounds = array<i64: 8, 256>}, {pipeline_mode = #tpu.pipeline_mode<synchronous>, transform_indices = @transform_1, window_bounds = array<i64: 256, 256>}, {transform_indices = @transform_2, window_bounds = array<i64: 8, 256>}, {transform_indices = @transform_3, window_bounds = array<i64: 8, 256>}]} {
    %c0 = arith.constant 0 : index
    %c0_0 = arith.constant 0 : index
    %0 = vector.load %arg1[%c0, %c0_0] : memref<8x256xbf16, #tpu.memory_space<vmem>>, vector<8x256xbf16>
    %c0_1 = arith.constant 0 : index
    %c0_2 = arith.constant 0 : index
    %1 = vector.load %arg2[%c0_1, %c0_2] : memref<256x256xbf16, #tpu.memory_space<vmem>>, vector<256x256xbf16>
    %cst = arith.constant dense<0.000000e+00> : vector<8x256xf32>
    %2 = tpu.matmul %0, %1, %cst {dimension_numbers = #tpu.dot_dimension_numbers<[1], [0], [0], [1], [0, 0, 1, 1], [], []>} : vector<8x256xbf16>, vector<256x256xbf16>, vector<8x256xf32> -> vector<8x256xf32>
    %c0_3 = arith.constant 0 : index
    %c0_4 = arith.constant 0 : index
    %3 = vector.load %arg3[%c0_3, %c0_4] : memref<8x256xf32, #tpu.memory_space<vmem>>, vector<8x256xf32>
    %4 = arith.addf %2, %3 : vector<8x256xf32>
    %c0_5 = arith.constant 0 : index
    %c0_6 = arith.constant 0 : index
    %5 = vector.load %arg4[%c0_5, %c0_6] : memref<8x256xf32, #tpu.memory_space<vmem>>, vector<8x256xf32>
    tpu.vector_store %arg4[%c0_5, %c0_6], %4 {strides = array<i32>} : memref<8x256xf32, #tpu.memory_space<vmem>>, vector<8x256xf32>,
    return
  }
  func.func @transform_0(%arg0: i32) -> (i32, i32) {
    %c0_i32 = arith.constant 0 : i32
    %c0_i32_0 = arith.constant 0 : i32
    return %arg0, %c0_i32 : i32, i32
  }
  func.func @transform_1(%arg0: i32) -> (i32, i32) {
    %c0_i32 = arith.constant 0 : i32
    %c0_i32_0 = arith.constant 0 : i32
    %c0_i32_1 = arith.constant 0 : i32
    return %c0_i32, %c0_i32_0 : i32, i32
  }
  func.func @transform_2(%arg0: i32) -> (i32, i32) {
    %c0_i32 = arith.constant 0 : i32
    %c0_i32_0 = arith.constant 0 : i32
    return %arg0, %c0_i32 : i32, i32
  }
  func.func @transform_3(%arg0: i32) -> (i32, i32) {
    %c0_i32 = arith.constant 0 : i32
    %c0_i32_0 = arith.constant 0 : i32
    return %arg0, %c0_i32 : i32, i32
  }
}

</mosaic_0001>

<llo_original>
// kernel: tpu_custom_call.1
$region0: #{tpu_custom_call.1}
  #allocation0 [shape = 'u32[]', space=smem, size = 0x4, offset = 0x4, fixed_abs, tag = 'smem constant byte address 0x4 - core index']
  #allocation1 [shape = 'u32[144,128]{1,0:T(1,128)}', space=vmem, size = 0x12000, scoped, tag = 'internal scratch']
  %s0 = inlined_call_operand.hbm [shape: bf16[8,256], index: 0, kind: input, shape index: {}]
  %s1 = inlined_call_operand.hbm [shape: bf16[256,256], index: 1, kind: input, shape index: {}]
  %s2 = inlined_call_operand.hbm [shape: f32[8,256], index: 2, kind: input, shape index: {}]
  %s3 = inlined_call_operand.hbm [shape: f32[8,256], index: 3, kind: output, shape index: {}]
  %s4 = sld [smem:[#allocation0]]
  $region34: #{tpu_custom_call.1} parent=0
    _
  %s6 = ssub.s32 1, %s4
  %s7 = scalar_select 0, %s6, %s4
  $region1: #{tpu_custom_call.1} parent=0
    #allocation2 [shape = 'u8[4096]{0}', space=vmem, size = 0x1000, scoped, tag = 'input window, operand 0, single buffered']
    #allocation3 [shape = 's32[1]{0}', space=sflag, size = 0x4, scoped, tag = 'scoped memory for tpu_custom_call.1']
    #allocation4 [shape = 's32[1]{0}', space=sflag, size = 0x4, scoped, tag = 'scoped memory for tpu_custom_call.1']
    #allocation5 [shape = 'u8[131072]{0}', space=vmem, size = 0x20000, scoped, tag = 'input window, operand 1, single buffered']
    #allocation6 [shape = 's32[1]{0}', space=sflag, size = 0x4, scoped, tag = 'scoped memory for tpu_custom_call.1']
    #allocation7 [shape = 'u8[8192]{0}', space=vmem, size = 0x2000, scoped, tag = 'input window, operand 2, single buffered']
    #allocation8 [shape = 'u8[8192]{0}', space=vmem, size = 0x2000, scoped, tag = 'output window, operand 0, single buffered']
    %8 = vsyncpa [#allocation3], 0
    %9 = vsyncpa [#allocation6], 0
    %10 = vsyncpa [#allocation4], 0
    // Predicated region
    $region2: #{tpu_custom_call.1} parent=1 // pred_check
      _
    $region3: #{tpu_custom_call.1} parent=1 // pred_check_branch
      %12 = sbr.rel (0) target = $region5
    $region4: #{tpu_custom_call.1} parent=1 // pred_region
      %s14 = ssub.s32 128, 128
      %15 = vsyncadd [#allocation3], %s14
      %s17 = sshll.u32 [#allocation2], 4
      %s18 = int_to_ptr.vmem [resolvable:$true] %s17
      %20 = dma.hbm_to_vmem [thread:$0]  %s0, 128, %s18, [#allocation3]
    $region5: #{tpu_custom_call.1} parent=1 // pred_fallthru
      _
    // Predicated region
    $region6: #{tpu_custom_call.1} parent=1 // pred_check
      _
    $region7: #{tpu_custom_call.1} parent=1 // pred_check_branch
      %22 = sbr.rel (0) target = $region9
    $region8: #{tpu_custom_call.1} parent=1 // pred_region
      %s24 = ssub.s32 4096, 4096
      %25 = vsyncadd [#allocation6], %s24
      %s26 = sshll.u32 [#allocation5], 4
      %s27 = int_to_ptr.vmem [resolvable:$true] %s26
      %32 = dma.hbm_to_vmem [thread:$0]  %s1, 4096, %s27, [#allocation6], 128, 128, 8
    $region9: #{tpu_custom_call.1} parent=1 // pred_fallthru
      _
    // Predicated region
    $region10: #{tpu_custom_call.1} parent=1 // pred_check
      _
    $region11: #{tpu_custom_call.1} parent=1 // pred_check_branch
      %34 = sbr.rel (0) target = $region13
    $region12: #{tpu_custom_call.1} parent=1 // pred_region
      %s36 = ssub.s32 256, 256
      %37 = vsyncadd [#allocation6], %s36
      %s39 = sshll.u32 [#allocation7], 4
      %s40 = int_to_ptr.vmem [resolvable:$true] %s39
      %42 = dma.hbm_to_vmem [thread:$0]  %s2, 256, %s40, [#allocation6]
    $region13: #{tpu_custom_call.1} parent=1 // pred_fallthru
      _
    // Predicated region
    $region14: #{tpu_custom_call.1} parent=1 // pred_check
      _
    $region15: #{tpu_custom_call.1} parent=1 // pred_check_branch
      %44 = sbr.rel (0) target = $region17
    $region16: #{tpu_custom_call.1} parent=1 // pred_region
      %45 = dma.done [#allocation3], 128
    $region17: #{tpu_custom_call.1} parent=1 // pred_fallthru
      _
    // Predicated region
    $region18: #{tpu_custom_call.1} parent=1 // pred_check
      _
    $region19: #{tpu_custom_call.1} parent=1 // pred_check_branch
      %47 = sbr.rel (0) target = $region21
    $region20: #{tpu_custom_call.1} parent=1 // pred_region
      %48 = dma.done [#allocation6], 4096
    $region21: #{tpu_custom_call.1} parent=1 // pred_fallthru
      _
    // Predicated region
    $region22: #{tpu_custom_call.1} parent=1 // pred_check
      _
    $region23: #{tpu_custom_call.1} parent=1 // pred_check_branch
      %50 = sbr.rel (0) target = $region25
    $region24: #{tpu_custom_call.1} parent=1 // pred_region
      %51 = dma.done [#allocation6], 256
    $region25: #{tpu_custom_call.1} parent=1 // pred_fallthru
      _
    %v52 = vld [vmem:[#allocation2] sm:$0xff]
    %v53 = vld [vmem:[#allocation5] sm:$0xff]
    %v54 = vld [vmem:[#allocation5 + $0x8] sm:$0xff]
    %v55 = vld [vmem:[#allocation5 + $0x10] sm:$0xff]
    %v56 = vld [vmem:[#allocation5 + $0x18] sm:$0xff]
    %v57 = vld [vmem:[#allocation5 + $0x20] sm:$0xff]
    %v58 = vld [vmem:[#allocation5 + $0x28] sm:$0xff]
    %v59 = vld [vmem:[#allocation5 + $0x30] sm:$0xff]
    %v60 = vld [vmem:[#allocation5 + $0x38] sm:$0xff]
    %v61 = vld [vmem:[#allocation5 + $0x40] sm:$0xff]
    %v62 = vld [vmem:[#allocation5 + $0x48] sm:$0xff]
    %v63 = vld [vmem:[#allocation5 + $0x50] sm:$0xff]
    %v64 = vld [vmem:[#allocation5 + $0x58] sm:$0xff]
    %v65 = vld [vmem:[#allocation5 + $0x60] sm:$0xff]
    %v66 = vld [vmem:[#allocation5 + $0x68] sm:$0xff]
    %v67 = vld [vmem:[#allocation5 + $0x70] sm:$0xff]
    %v68 = vld [vmem:[#allocation5 + $0x78] sm:$0xff]
    %v69 = vld [vmem:[#allocation5 + $0x80] sm:$0xff]
    %v70 = vld [vmem:[#allocation5 + $0x88] sm:$0xff]
    %v71 = vld [vmem:[#allocation5 + $0x90] sm:$0xff]
    %v72 = vld [vmem:[#allocation5 + $0x98] sm:$0xff]
    %v73 = vld [vmem:[#allocation5 + $0xa0] sm:$0xff]
    %v74 = vld [vmem:[#allocation5 + $0xa8] sm:$0xff]
    %v75 = vld [vmem:[#allocation5 + $0xb0] sm:$0xff]
    %v76 = vld [vmem:[#allocation5 + $0xb8] sm:$0xff]
    %v77 = vld [vmem:[#allocation5 + $0xc0] sm:$0xff]
    %v78 = vld [vmem:[#allocation5 + $0xc8] sm:$0xff]
    %v79 = vld [vmem:[#allocation5 + $0xd0] sm:$0xff]
    %v80 = vld [vmem:[#allocation5 + $0xd8] sm:$0xff]
    %v81 = vld [vmem:[#allocation5 + $0xe0] sm:$0xff]
    %v82 = vld [vmem:[#allocation5 + $0xe8] sm:$0xff]
    %v83 = vld [vmem:[#allocation5 + $0xf0] sm:$0xff]
    %v84 = vld [vmem:[#allocation5 + $0xf8] sm:$0xff]
    %v85 = vld [vmem:[#allocation7] sm:$0xff]
    %v86 = vld [vmem:[#allocation7 + $0x8] sm:$0xff]
    %v88 = vunpack.c.l.b16 %v52
    %v89 = vunpack.c.h.b16 %v52
    %v90 = vpack.c.b16 %v88, %v88
    %v91 = vpack.c.b16 %v89, %v89
    %v126 = vunpack.c.l.b16 %v53
    %v127 = vunpack.c.h.b16 %v53
    %v128 = vunpack.c.l.b16 %v54
    %v129 = vunpack.c.h.b16 %v54
    %v130 = vunpack.c.l.b16 %v55
    %v131 = vunpack.c.h.b16 %v55
    %v132 = vunpack.c.l.b16 %v56
    %v133 = vunpack.c.h.b16 %v56
    %v134 = vunpack.c.l.b16 %v57
    %v135 = vunpack.c.h.b16 %v57
    %v136 = vunpack.c.l.b16 %v58
    %v137 = vunpack.c.h.b16 %v58
    %v138 = vunpack.c.l.b16 %v59
    %v139 = vunpack.c.h.b16 %v59
    %v140 = vunpack.c.l.b16 %v60
    %v141 = vunpack.c.h.b16 %v60
    %v142 = vunpack.c.l.b16 %v61
    %v143 = vunpack.c.h.b16 %v61
    %v144 = vunpack.c.l.b16 %v62
    %v145 = vunpack.c.h.b16 %v62
    %v146 = vunpack.c.l.b16 %v63
    %v147 = vunpack.c.h.b16 %v63
    %v148 = vunpack.c.l.b16 %v64
    %v149 = vunpack.c.h.b16 %v64
    %v150 = vunpack.c.l.b16 %v65
    %v151 = vunpack.c.h.b16 %v65
    %v152 = vunpack.c.l.b16 %v66
    %v153 = vunpack.c.h.b16 %v66
    %v154 = vunpack.c.l.b16 %v67
    %v155 = vunpack.c.h.b16 %v67
    %v156 = vunpack.c.l.b16 %v68
    %v157 = vunpack.c.h.b16 %v68
    %v158 = vunpack.c.l.b16 %v69
    %v159 = vunpack.c.h.b16 %v69
    %v160 = vunpack.c.l.b16 %v70
    %v161 = vunpack.c.h.b16 %v70
    %v162 = vunpack.c.l.b16 %v71
    %v163 = vunpack.c.h.b16 %v71
    %v164 = vunpack.c.l.b16 %v72
    %v165 = vunpack.c.h.b16 %v72
    %v166 = vunpack.c.l.b16 %v73
    %v167 = vunpack.c.h.b16 %v73
    %v168 = vunpack.c.l.b16 %v74
    %v169 = vunpack.c.h.b16 %v74
    %v170 = vunpack.c.l.b16 %v75
    %v171 = vunpack.c.h.b16 %v75
    %v172 = vunpack.c.l.b16 %v76
    %v173 = vunpack.c.h.b16 %v76
    %v174 = vunpack.c.l.b16 %v77
    %v175 = vunpack.c.h.b16 %v77
    %v176 = vunpack.c.l.b16 %v78
    %v177 = vunpack.c.h.b16 %v78
    %v178 = vunpack.c.l.b16 %v79
    %v179 = vunpack.c.h.b16 %v79
    %v180 = vunpack.c.l.b16 %v80
    %v181 = vunpack.c.h.b16 %v80
    %v182 = vunpack.c.l.b16 %v81
    %v183 = vunpack.c.h.b16 %v81
    %v184 = vunpack.c.l.b16 %v82
    %v185 = vunpack.c.h.b16 %v82
    %v186 = vunpack.c.l.b16 %v83
    %v187 = vunpack.c.h.b16 %v83
    %v188 = vunpack.c.l.b16 %v84
    %v189 = vunpack.c.h.b16 %v84
    %v190 = vpack.c.b16 %v128, %v126
    %v191 = vpack.c.b16 %v129, %v127
    %v192 = vpack.c.b16 %v132, %v130
    %v193 = vpack.c.b16 %v133, %v131
    %v194 = vpack.c.b16 %v136, %v134
    %v195 = vpack.c.b16 %v137, %v135
    %v196 = vpack.c.b16 %v140, %v138
    %v197 = vpack.c.b16 %v141, %v139
    %v198 = vpack.c.b16 %v144, %v142
    %v199 = vpack.c.b16 %v145, %v143
    %v200 = vpack.c.b16 %v148, %v146
    %v201 = vpack.c.b16 %v149, %v147
    %v202 = vpack.c.b16 %v152, %v150
    %v203 = vpack.c.b16 %v153, %v151
    %v204 = vpack.c.b16 %v156, %v154
    %v205 = vpack.c.b16 %v157, %v155
    %v206 = vpack.c.b16 %v160, %v158
    %v207 = vpack.c.b16 %v161, %v159
    %v208 = vpack.c.b16 %v164, %v162
    %v209 = vpack.c.b16 %v165, %v163
    %v210 = vpack.c.b16 %v168, %v166
    %v211 = vpack.c.b16 %v169, %v167
    %v212 = vpack.c.b16 %v172, %v170
    %v213 = vpack.c.b16 %v173, %v171
    %v214 = vpack.c.b16 %v176, %v174
    %v215 = vpack.c.b16 %v177, %v175
    %v216 = vpack.c.b16 %v180, %v178
    %v217 = vpack.c.b16 %v181, %v179
    %v218 = vpack.c.b16 %v184, %v182
    %v219 = vpack.c.b16 %v185, %v183
    %v220 = vpack.c.b16 %v188, %v186
    %v221 = vpack.c.b16 %v189, %v187
    %254 = vmatprep.subr.bf16.mxu0 %v191
    %255 = vmatpush1.bf16.msra.mxu0 %v190
    %256 = vmatprep.subr.bf16.mxu0 %v193
    %257 = vmatpush1.bf16.msra.mxu0 %v192
    %258 = vmatprep.subr.bf16.mxu0 %v195
    %259 = vmatpush1.bf16.msra.mxu0 %v194
    %260 = vmatprep.subr.bf16.mxu0 %v197
    %261 = vmatpush1.bf16.msra.mxu0 %v196
    %262 = vmatprep.subr.bf16.mxu0 %v199
    %263 = vmatpush1.bf16.msra.mxu0 %v198
    %264 = vmatprep.subr.bf16.mxu0 %v201
    %265 = vmatpush1.bf16.msra.mxu0 %v200
    %266 = vmatprep.subr.bf16.mxu0 %v203
    %267 = vmatpush1.bf16.msra.mxu0 %v202
    %268 = vmatprep.subr.bf16.mxu0 %v205
    %269 = vmatpush1.bf16.msra.mxu0 %v204
    %270 = vmatprep.subr.bf16.mxu0 %v207
    %271 = vmatpush1.bf16.msra.mxu0 %v206
    %272 = vmatprep.subr.bf16.mxu0 %v209
    %273 = vmatpush1.bf16.msra.mxu0 %v208
    %274 = vmatprep.subr.bf16.mxu0 %v211
    %275 = vmatpush1.bf16.msra.mxu0 %v210
    %276 = vmatprep.subr.bf16.mxu0 %v213
    %277 = vmatpush1.bf16.msra.mxu0 %v212
    %278 = vmatprep.subr.bf16.mxu0 %v215
    %279 = vmatpush1.bf16.msra.mxu0 %v214
    %280 = vmatprep.subr.bf16.mxu0 %v217
    %281 = vmatpush1.bf16.msra.mxu0 %v216
    %282 = vmatprep.subr.bf16.mxu0 %v219
    %283 = vmatpush1.bf16.msra.mxu0 %v218
    %284 = vmatprep.subr.bf16.mxu0 %v221
    %285 = vmatpush1.bf16.msra.mxu0 %v220
    %286 = vmatprep.mubr.bf16.mxu0 %v91
    %287 = vmatmul.mubr.bf16.gmra.mrb[0].mxu0 %v90
    %v288 = vpop.f32.mrb[0].mxu0
    %v289 = vadd.f32 %v85, %v288
    %v290 = vpop.f32.mrb[0].mxu0
    %v291 = vadd.f32 %v86, %v290
    %v292 = vpop.f32.mrb[0].mxu0
    %v293 = vpop.f32.mrb[0].mxu0
    %294 = vdwg.mxu0
    %295 = vst [vmem:[#allocation8] sm:$0xff] %v289
    %296 = vst [vmem:[#allocation8 + $0x8] sm:$0xff] %v291
    // Predicated region
    $region26: #{tpu_custom_call.1} parent=1 // pred_check
      _
    $region27: #{tpu_custom_call.1} parent=1 // pred_check_branch
      %298 = sbr.rel (0) target = $region29
    $region28: #{tpu_custom_call.1} parent=1 // pred_region
      %s300 = ssub.s32 256, 256
      %301 = vsyncadd [#allocation4], %s300
      %s303 = sshll.u32 [#allocation8], 4
      %s304 = int_to_ptr.vmem [resolvable:$true] %s303
      %306 = dma.vmem_to_hbm [thread:$0]  %s304, 256, %s3, [#allocation4]
    $region29: #{tpu_custom_call.1} parent=1 // pred_fallthru
      _
    // Predicated region
    $region30: #{tpu_custom_call.1} parent=1 // pred_check
      _
    $region31: #{tpu_custom_call.1} parent=1 // pred_check_branch
      %308 = sbr.rel (0) target = $region33
    $region32: #{tpu_custom_call.1} parent=1 // pred_region
      %309 = dma.done [#allocation4], 256
    $region33: #{tpu_custom_call.1} parent=1 // pred_fallthru
      _
    %310 = vsyncpa [#allocation3], 1
    %311 = vsyncpa [#allocation6], 1
    %312 = vsyncpa [#allocation4], 1

</llo_original>
